<compile_context>
chip_gen: v5e
topology: v5e:2x2
jax: 0.10.0
libtpu: 0.0.40
codegen_flags: <defaults>
</compile_context>

<pallas_src>
import jax
import jax.numpy as jnp
from jax.experimental import pallas as pl
from jax.experimental.pallas import tpu as pltpu


_LANES = 128
# Below this, XLA's fused single-pass mean beats a kernel launch.
# TODO(synk): benchmark the true crossover per generation.
_PALLAS_MIN_ELEMS = 262144


def _cdiv(a, b):
    return -(-a // b)


def _round_up(x, m):
    return ((x + m - 1) // m) * m


def _arch_config():
    """(cores, max_tile_rows, input_buffers) per TPU generation."""
    try:
        kind = jax.devices()[0].device_kind.lower()
    except Exception:
        kind = ""
    if "v7" in kind:
        # 2 TensorCores/chip -> split the stream across both; a third input
        # buffer hides the per-step overhead at v7x HBM bandwidth.
        # 3 streams x 3 bufs x 2 MiB = 18 MiB, within the 32 MiB scoped default.
        return 2, 4096, 3
    if "v6" in kind:
        # Single TC; 32 MiB default scoped VMEM easily holds 3 x 2 x 2 MiB.
        return 1, 4096, 2
    # v5e and older / unknown: 16 MiB default scoped VMEM -> 1 MiB blocks.
    return 1, 2048, 2


def _make_in_spec(tile_rows, num_i, last_block, buffers):
    def index_map(j, i):
        # Clamp so an overshoot grid step (fully past the data, masked to zero
        # in-kernel) never issues an out-of-bounds block index.
        return (jnp.minimum(j * num_i + i, last_block), 0)

    if buffers > 2 and hasattr(pl, "Buffered"):
        try:
            return pl.BlockSpec((tile_rows, _LANES), index_map,
                                pipeline_mode=pl.Buffered(buffers))
        except TypeError:   # older jax without pipeline_mode kwarg
            pass
    return pl.BlockSpec((tile_rows, _LANES), index_map)


def _make_sse_kernel(n_preds, rows_valid, tile_rows, num_i):
    """Per-lane partial SSE sums for `n_preds` predictions, accumulated
    directly into the resident (8, 128) output block of each core."""

    def kernel(*refs):
        pred_refs = refs[:n_preds]
        tgt_ref = refs[n_preds]
        out_refs = refs[n_preds + 1:]

        j = pl.program_id(0)        # core-split axis ("parallel")
        i = pl.program_id(1)        # streaming/reduction axis ("arbitrary")

        @pl.when(i == 0)
        def _():
            for out in out_refs:
                out[...] = jnp.zeros_like(out)

        # Rows at/after rows_valid (partial last block, or a clamped overshoot
        # block) hold unspecified data after the DMA -> zero their contribution.
        block_start = (j * num_i + i) * tile_rows
        row = jax.lax.broadcasted_iota(jnp.int32, (tile_rows, 1), 0)
        row_mask = (block_start + row) < rows_valid

        t = tgt_ref[...].astype(jnp.float32)   # narrow dtypes are cast on-chip
        for pred_ref, out in zip(pred_refs, out_refs):
            d = jnp.where(row_mask, pred_ref[...].astype(jnp.float32) - t, 0.0)
            # (tile_rows,128) -> (tile_rows//8, 8, 128): sublane-aligned,
            # layout-preserving split; the axis-0 sum is pure VPU vreg adds.
            dd = (d * d).reshape(tile_rows // 8, 8, _LANES)
            out[...] += jnp.sum(dd, axis=0)

    return kernel


def _sum_squared_errors(preds, targets, cores, max_tile_rows, buffers):
    """Fused sum((pred_k - targets)^2) for each pred_k via one pallas_call."""
    n_preds = len(preds)
    n_elems = targets.size
    rows_full = n_elems // _LANES
    main_elems = rows_full * _LANES

    # Keep native dtypes end-to-end: HBM bytes are the only real cost here.
    flats = [jnp.ravel(p) for p in preds] + [jnp.ravel(targets)]

    # Ragged (<128 element) lane tail: plain XLA, negligible.
    if main_elems < n_elems:
        t_tail = flats[-1][main_elems:].astype(jnp.float32)
        sses = [jnp.sum((f[main_elems:].astype(jnp.float32) - t_tail) ** 2)
                for f in flats[:-1]]
    else:
        sses = [jnp.zeros((), jnp.float32) for _ in range(n_preds)]

    if rows_full == 0:
        return sses

    if main_elems < n_elems:
        # TODO(synk): this prefix slice may materialize a copy when n_elems is
        # not a multiple of 128; a memory_space=pl.ANY flat-offset DMA path
        # would stream the arrays fully in place even in the ragged case.
        flats = [f[:main_elems] for f in flats]
    # Lane-dense view: no pad, no extra HBM pass (pure reshape).
    mains = [f.reshape(rows_full, _LANES) for f in flats]

    if rows_full < cores * 16:
        cores = 1
    per_core = _cdiv(rows_full, cores)
    num_i = _cdiv(per_core, max_tile_rows)
    tile_rows = _round_up(_cdiv(per_core, num_i), 16)   # 16: bf16/f32 sublane-safe
    last_block = _cdiv(rows_full, tile_rows) - 1

    in_spec = _make_in_spec(tile_rows, num_i, last_block, buffers)
    out_spec = pl.BlockSpec((8, _LANES), lambda j, i: (j, 0))

    itemsize = jnp.dtype(targets.dtype).itemsize
    cost = pl.CostEstimate(
        flops=3 * main_elems * n_preds,
        transcendentals=0,
        bytes_accessed=itemsize * main_elems * (n_preds + 1)
        + 4 * cores * 8 * _LANES * n_preds,
    )

    outs = pl.pallas_call(
        _make_sse_kernel(n_preds, rows_full, tile_rows, num_i),
        out_shape=[jax.ShapeDtypeStruct((cores * 8, _LANES), jnp.float32)
                   for _ in range(n_preds)],
        grid_spec=pltpu.PrefetchScalarGridSpec(
            num_scalar_prefetch=0,
            grid=(cores, num_i),
            in_specs=[in_spec] * (n_preds + 1),
            out_specs=[out_spec] * n_preds,
        ),
        compiler_params=pltpu.CompilerParams(
            dimension_semantics=("parallel", "arbitrary")),
        cost_estimate=cost,
    )(*mains)

    # Final tiny reduction of the per-core (8,128) partials in plain JAX.
    return [s + jnp.sum(o) for s, o in zip(sses, outs)]


def color_loss(inputs, targets, coef=1.0, force_pallas=False,
               _max_tile_rows=None, _cores=None):
    """JAX/Pallas equivalent of ColorLoss.forward.

    inputs: dict with 'rgb_coarse' (and optionally 'rgb_fine'), same shape as
    targets. Returns coef * (mean SSE of coarse [+ mean SSE of fine]).
    `_max_tile_rows` / `_cores` are test-only overrides.
    """
    preds = [inputs["rgb_coarse"]]
    if "rgb_fine" in inputs:
        preds.append(inputs["rgb_fine"])

    n_elems = targets.size
    if not force_pallas and n_elems < _PALLAS_MIN_ELEMS:
        # Tiny problems: kernel launch + pipeline fill cost more than fused XLA.
        t32 = targets.astype(jnp.float32)
        loss = sum(jnp.mean((p.astype(jnp.float32) - t32) ** 2) for p in preds)
        return coef * loss

    cores, max_tile_rows, buffers = _arch_config()
    if _cores is not None:
        cores = _cores
    if _max_tile_rows is not None:
        max_tile_rows = _max_tile_rows

    sses = _sum_squared_errors(preds, targets, cores, max_tile_rows, buffers)
    loss = sum(sses) / float(n_elems)
    return coef * loss


if __name__ == "__main__":
    key = jax.random.PRNGKey(0)
    k1, k2, k3 = jax.random.split(key, 3)

    n_rays, channels = 128, 3
    rgb_coarse = jax.random.uniform(k1, (n_rays, channels), dtype=jnp.float32)
    rgb_fine = jax.random.uniform(k2, (n_rays, channels), dtype=jnp.float32)
    targets = jax.random.uniform(k3, (n_rays, channels), dtype=jnp.float32)
    ref = jnp.mean((rgb_coarse - targets) ** 2) + jnp.mean((rgb_fine - targets) ** 2)

    # 1) small coarse+fine case: single partial tile, in-kernel row masking.
    loss = color_loss({"rgb_coarse": rgb_coarse, "rgb_fine": rgb_fine}, targets,
                      coef=1.0, force_pallas=True)
    loss = jax.block_until_ready(loss)
    assert jnp.allclose(loss, ref, rtol=1e-5, atol=1e-6), (loss, ref)

    # 2) coarse-only variant (single-prediction kernel), coef != 1.
    loss_c = color_loss({"rgb_coarse": rgb_coarse}, targets, coef=2.0,
                        force_pallas=True)
    loss_c = jax.block_until_ready(loss_c)
    ref_c = 2.0 * jnp.mean((rgb_coarse - targets) ** 2)
    assert jnp.allclose(loss_c, ref_c, rtol=1e-5, atol=1e-6), (loss_c, ref_c)

    # 3) larger case: multi-step accumulation, partial last block, explicit
    #    2-way core split (serial outer loop on 1-TC chips, both TCs on v7x).
    kb1, kb2, kb3 = jax.random.split(jax.random.PRNGKey(1), 3)
    n_big = 48000
    cb = jax.random.uniform(kb1, (n_big, 3), dtype=jnp.float32)
    fb = jax.random.uniform(kb2, (n_big, 3), dtype=jnp.float32)
    tb = jax.random.uniform(kb3, (n_big, 3), dtype=jnp.float32)
    loss_b = color_loss({"rgb_coarse": cb, "rgb_fine": fb}, tb, coef=1.0,
                        force_pallas=True, _max_tile_rows=128, _cores=2)
    loss_b = jax.block_until_ready(loss_b)
    ref_b = jnp.mean((cb - tb) ** 2) + jnp.mean((fb - tb) ** 2)
    assert jnp.allclose(loss_b, ref_b, rtol=1e-5, atol=1e-6), (loss_b, ref_b)

    # 4) ragged element count (n_elems % 128 != 0): XLA handles the <128 tail.
    kr1, kr2 = jax.random.split(jax.random.PRNGKey(2), 2)
    cr = jax.random.uniform(kr1, (1000, 3), dtype=jnp.float32)
    tr = jax.random.uniform(kr2, (1000, 3), dtype=jnp.float32)
    loss_r = color_loss({"rgb_coarse": cr}, tr, coef=1.0, force_pallas=True)
    loss_r = jax.block_until_ready(loss_r)
    ref_r = jnp.mean((cr - tr) ** 2)
    assert jnp.allclose(loss_r, ref_r, rtol=1e-5, atol=1e-6), (loss_r, ref_r)

    # 5) auto-dispatch below threshold -> fused XLA fallback path.
    loss_x = color_loss({"rgb_coarse": rgb_coarse, "rgb_fine": rgb_fine}, targets)
    loss_x = jax.block_until_ready(loss_x)
    assert jnp.allclose(loss_x, ref, rtol=1e-5, atol=1e-6), (loss_x, ref)

    print("KERNEL_OK")
</pallas_src>

<mosaic_0001>
module attributes {stable_mosaic.version = 11 : i64} {
  func.func @kernel(%arg0: i32, %arg1: i32, %arg2: memref<16x128xf32, #tpu.memory_space<vmem>>, %arg3: memref<16x128xf32, #tpu.memory_space<vmem>>, %arg4: memref<16x128xf32, #tpu.memory_space<vmem>>, %arg5: memref<8x128xf32, #tpu.memory_space<vmem>>, %arg6: memref<8x128xf32, #tpu.memory_space<vmem>>) attributes {dimension_semantics = [#tpu.dimension_semantics<parallel>, #tpu.dimension_semantics<arbitrary>], iteration_bounds = array<i64: 1, 1>, scalar_prefetch = 0 : i64, scratch_operands = 0 : i64, tpu.core_type = #tpu.core_type<tc>, window_params = [{transform_indices = @transform_0, window_bounds = array<i64: 16, 128>}, {transform_indices = @transform_1, window_bounds = array<i64: 16, 128>}, {transform_indices = @transform_2, window_bounds = array<i64: 16, 128>}, {transform_indices = @transform_3, window_bounds = array<i64: 8, 128>}, {transform_indices = @transform_4, window_bounds = array<i64: 8, 128>}]} {
    %c0_i32 = arith.constant 0 : i32
    %0 = arith.cmpi eq, %arg1, %c0_i32 : i32
    %1 = arith.extui %0 : i1 to i32
    %c0_i32_0 = arith.constant 0 : i32
    %2 = arith.cmpi ne, %1, %c0_i32_0 : i32
    scf.if %2 {
      %cst_17 = arith.constant 0.000000e+00 : f32
      %36 = vector.broadcast %cst_17 : f32 to vector<8x128xf32>
      %c0_18 = arith.constant 0 : index
      %c0_19 = arith.constant 0 : index
      %37 = vector.load %arg5[%c0_18, %c0_19] : memref<8x128xf32, #tpu.memory_space<vmem>>, vector<8x128xf32>
      tpu.vector_store %arg5[%c0_18, %c0_19], %36 {strides = array<i32>} : memref<8x128xf32, #tpu.memory_space<vmem>>, vector<8x128xf32>,
      %cst_20 = arith.constant 0.000000e+00 : f32
      %38 = vector.broadcast %cst_20 : f32 to vector<8x128xf32>
      %c0_21 = arith.constant 0 : index
      %c0_22 = arith.constant 0 : index
      %39 = vector.load %arg6[%c0_21, %c0_22] : memref<8x128xf32, #tpu.memory_space<vmem>>, vector<8x128xf32>
      tpu.vector_store %arg6[%c0_21, %c0_22], %38 {strides = array<i32>} : memref<8x128xf32, #tpu.memory_space<vmem>>, vector<8x128xf32>,
    } else {
    }
    %c1_i32 = arith.constant 1 : i32
    %3 = arith.muli %arg0, %c1_i32 : i32
    %4 = arith.addi %3, %arg1 : i32
    %c16_i32 = arith.constant 16 : i32
    %5 = arith.muli %4, %c16_i32 : i32
    %6 = tpu.iota {dimensions = array<i32: 0>} : vector<16x1xi32>
    %7 = vector.broadcast %5 : i32 to vector<16x1xi32>
    %8 = arith.addi %7, %6 : vector<16x1xi32>
    %c3_i32 = arith.constant 3 : i32
    %9 = vector.broadcast %c3_i32 : i32 to vector<16x1xi32>
    %10 = arith.cmpi slt, %8, %9 : vector<16x1xi32>
    %c0 = arith.constant 0 : index
    %c0_1 = arith.constant 0 : index
    %11 = vector.load %arg4[%c0, %c0_1] : memref<16x128xf32, #tpu.memory_space<vmem>>, vector<16x128xf32>
    %c0_2 = arith.constant 0 : index
    %c0_3 = arith.constant 0 : index
    %12 = vector.load %arg2[%c0_2, %c0_3] : memref<16x128xf32, #tpu.memory_space<vmem>>, vector<16x128xf32>
    %13 = arith.subf %12, %11 : vector<16x128xf32>
    %cst = arith.constant 0.000000e+00 : f32
    %14 = vector.shape_cast %10 : vector<16x1xi1> to vector<16x1xi1>
    %15 = vector.broadcast %14 : vector<16x1xi1> to vector<16x128xi1>
    %16 = vector.broadcast %cst : f32 to vector<16x128xf32>
    %17 = arith.select %15, %13, %16 : vector<16x128xi1>, vector<16x128xf32>
    %18 = arith.mulf %17, %17 : vector<16x128xf32>
    %19 = vector.shape_cast %18 : vector<16x128xf32> to vector<2x8x128xf32>
    %c0_4 = arith.constant 0 : index
    %c0_5 = arith.constant 0 : index
    %20 = vector.load %arg5[%c0_4, %c0_5] : memref<8x128xf32, #tpu.memory_space<vmem>>, vector<8x128xf32>
    %cst_6 = arith.constant dense<0.000000e+00> : vector<8x128xf32>
    %21 = vector.multi_reduction <add>, %19, %cst_6 [0] : vector<2x8x128xf32> to vector<8x128xf32>
    %22 = arith.addf %20, %21 : vector<8x128xf32>
    %c0_7 = arith.constant 0 : index
    %c0_8 = arith.constant 0 : index
    %23 = vector.load %arg5[%c0_7, %c0_8] : memref<8x128xf32, #tpu.memory_space<vmem>>, vector<8x128xf32>
    tpu.vector_store %arg5[%c0_7, %c0_8], %22 {strides = array<i32>} : memref<8x128xf32, #tpu.memory_space<vmem>>, vector<8x128xf32>,
    %c0_9 = arith.constant 0 : index
    %c0_10 = arith.constant 0 : index
    %24 = vector.load %arg3[%c0_9, %c0_10] : memref<16x128xf32, #tpu.memory_space<vmem>>, vector<16x128xf32>
    %25 = arith.subf %24, %11 : vector<16x128xf32>
    %cst_11 = arith.constant 0.000000e+00 : f32
    %26 = vector.shape_cast %10 : vector<16x1xi1> to vector<16x1xi1>
    %27 = vector.broadcast %26 : vector<16x1xi1> to vector<16x128xi1>
    %28 = vector.broadcast %cst_11 : f32 to vector<16x128xf32>
    %29 = arith.select %27, %25, %28 : vector<16x128xi1>, vector<16x128xf32>
    %30 = arith.mulf %29, %29 : vector<16x128xf32>
    %31 = vector.shape_cast %30 : vector<16x128xf32> to vector<2x8x128xf32>
    %c0_12 = arith.constant 0 : index
    %c0_13 = arith.constant 0 : index
    %32 = vector.load %arg6[%c0_12, %c0_13] : memref<8x128xf32, #tpu.memory_space<vmem>>, vector<8x128xf32>
    %cst_14 = arith.constant dense<0.000000e+00> : vector<8x128xf32>
    %33 = vector.multi_reduction <add>, %31, %cst_14 [0] : vector<2x8x128xf32> to vector<8x128xf32>
    %34 = arith.addf %32, %33 : vector<8x128xf32>
    %c0_15 = arith.constant 0 : index
    %c0_16 = arith.constant 0 : index
    %35 = vector.load %arg6[%c0_15, %c0_16] : memref<8x128xf32, #tpu.memory_space<vmem>>, vector<8x128xf32>
    tpu.vector_store %arg6[%c0_15, %c0_16], %34 {strides = array<i32>} : memref<8x128xf32, #tpu.memory_space<vmem>>, vector<8x128xf32>,
    return
  }
  func.func @transform_0(%arg0: i32, %arg1: i32) -> (i32, i32) {
    %c1_i32 = arith.constant 1 : i32
    %0 = arith.muli %arg0, %c1_i32 : i32
    %1 = arith.addi %0, %arg1 : i32
    %c0_i32 = arith.constant 0 : i32
    %2 = arith.minsi %1, %c0_i32 : i32
    %c0_i32_0 = arith.constant 0 : i32
    %c0_i32_1 = arith.constant 0 : i32
    return %2, %c0_i32_0 : i32, i32
  }
  func.func @transform_1(%arg0: i32, %arg1: i32) -> (i32, i32) {
    %c1_i32 = arith.constant 1 : i32
    %0 = arith.muli %arg0, %c1_i32 : i32
    %1 = arith.addi %0, %arg1 : i32
    %c0_i32 = arith.constant 0 : i32
    %2 = arith.minsi %1, %c0_i32 : i32
    %c0_i32_0 = arith.constant 0 : i32
    %c0_i32_1 = arith.constant 0 : i32
    return %2, %c0_i32_0 : i32, i32
  }
  func.func @transform_2(%arg0: i32, %arg1: i32) -> (i32, i32) {
    %c1_i32 = arith.constant 1 : i32
    %0 = arith.muli %arg0, %c1_i32 : i32
    %1 = arith.addi %0, %arg1 : i32
    %c0_i32 = arith.constant 0 : i32
    %2 = arith.minsi %1, %c0_i32 : i32
    %c0_i32_0 = arith.constant 0 : i32
    %c0_i32_1 = arith.constant 0 : i32
    return %2, %c0_i32_0 : i32, i32
  }
  func.func @transform_3(%arg0: i32, %arg1: i32) -> (i32, i32) {
    %c0_i32 = arith.constant 0 : i32
    %c0_i32_0 = arith.constant 0 : i32
    return %arg0, %c0_i32 : i32, i32
  }
  func.func @transform_4(%arg0: i32, %arg1: i32) -> (i32, i32) {
    %c0_i32 = arith.constant 0 : i32
    %c0_i32_0 = arith.constant 0 : i32
    return %arg0, %c0_i32 : i32, i32
  }
}

</mosaic_0001>

<llo_original>
// kernel: tpu_custom_call.1
$region0: #{tpu_custom_call.1}
  #allocation0 [shape = 'u32[]', space=smem, size = 0x4, offset = 0x4, fixed_abs, tag = 'smem constant byte address 0x4 - core index']
  #allocation1 [shape = 'u32[72,128]{1,0:T(1,128)}', space=vmem, size = 0x9000, scoped, tag = 'internal scratch']
  %s0 = inlined_call_operand.hbm [shape: f32[3,128], index: 0, kind: input, shape index: {}]
  %s1 = inlined_call_operand.hbm [shape: f32[3,128], index: 1, kind: input, shape index: {}]
  %s2 = inlined_call_operand.hbm [shape: f32[3,128], index: 2, kind: input, shape index: {}]
  %s3 = inlined_call_operand.hbm [shape: f32[8,128], index: 3, kind: output, shape index: {0}]
  %s4 = inlined_call_operand.hbm [shape: f32[8,128], index: 4, kind: output, shape index: {1}]
  %5 = xla_tuple %s3, %s4
  %s6 = sld [smem:[#allocation0]]
  $region46: #{tpu_custom_call.1} parent=0
    _
  %s8 = ssub.s32 1, %s6
  %s9 = scalar_select 0, %s8, %s6
  $region1: #{tpu_custom_call.1} parent=0
    #allocation2 [shape = 'u8[8192]{0}', space=vmem, size = 0x2000, scoped, tag = 'input window, operand 0, single buffered']
    #allocation3 [shape = 's32[1]{0}', space=sflag, size = 0x4, scoped, tag = 'scoped memory for tpu_custom_call.1']
    #allocation4 [shape = 's32[1]{0}', space=sflag, size = 0x4, scoped, tag = 'scoped memory for tpu_custom_call.1']
    #allocation5 [shape = 'u8[8192]{0}', space=vmem, size = 0x2000, scoped, tag = 'input window, operand 1, single buffered']
    #allocation6 [shape = 's32[1]{0}', space=sflag, size = 0x4, scoped, tag = 'scoped memory for tpu_custom_call.1']
    #allocation7 [shape = 'u8[8192]{0}', space=vmem, size = 0x2000, scoped, tag = 'input window, operand 2, single buffered']
    #allocation8 [shape = 'u8[4096]{0}', space=vmem, size = 0x1000, scoped, tag = 'output window, operand 0, single buffered']
    #allocation9 [shape = 'u8[4096]{0}', space=vmem, size = 0x1000, scoped, tag = 'output window, operand 1, single buffered']
    #allocation10 [shape = 's32[1]{0}', space=sflag, size = 0x4, scoped, tag = 'scoped memory for tpu_custom_call.1']
    %10 = vsyncpa [#allocation3], 0
    %11 = vsyncpa [#allocation6], 0
    %12 = vsyncpa [#allocation4], 0
    %13 = vsyncpa [#allocation10], 0
    // Predicated region
    $region2: #{tpu_custom_call.1} parent=1 // pred_check
      _
    $region3: #{tpu_custom_call.1} parent=1 // pred_check_branch
      %15 = sbr.rel (0) target = $region5
    $region4: #{tpu_custom_call.1} parent=1 // pred_region
      %s16 = sadd.s32 0, 0
      %p17 = scmp.lt.s32.totalorder %s16, 0
      %s18 = scalar_select %p17, %s16, 0
      %s19 = smul.u32 4, %s18
      %s20 = ssub.s32 1, %s19
      %s21 = smul.u32 4, %s20
      %s22 = ssub.s32 16, %s21
      %s23 = sshll.u32 %s22, 4
      %24 = vsyncadd [#allocation3], %s23
      %p25 = scmp.ne.s32.totalorder 0, %s21
      %s26 = smul.addr %s19, 4
      %s27 = scalar_lea.hbm %s0, %s26
      %s28 = smul.u32 4, %s20
      %s29 = sshll.u32 %s27, 4
      %s30 = int_to_ptr.hbm [resolvable:$true] %s29
      %s31 = sshll.u32 [#allocation2], 4
      %s32 = int_to_ptr.vmem [resolvable:$true] %s31
      %s33 = sshll.u32 %s28, 4
      %37 = dma.hbm_to_vmem [thread:$0]  (%p25), %s30, %s33, %s32, [#allocation3], 64, 64, 4
    $region5: #{tpu_custom_call.1} parent=1 // pred_fallthru
      _
    // Predicated region
    $region6: #{tpu_custom_call.1} parent=1 // pred_check
      _
    $region7: #{tpu_custom_call.1} parent=1 // pred_check_branch
      %39 = sbr.rel (0) target = $region9
    $region8: #{tpu_custom_call.1} parent=1 // pred_region
      %s40 = sadd.s32 0, 0
      %p41 = scmp.lt.s32.totalorder %s40, 0
      %s42 = scalar_select %p41, %s40, 0
      %s43 = smul.u32 4, %s42
      %s44 = ssub.s32 1, %s43
      %s45 = smul.u32 4, %s44
      %s46 = ssub.s32 16, %s45
      %s47 = sshll.u32 %s46, 4
      %48 = vsyncadd [#allocation6], %s47
      %p49 = scmp.ne.s32.totalorder 0, %s45
      %s50 = smul.addr %s43, 4
      %s51 = scalar_lea.hbm %s1, %s50
      %s52 = smul.u32 4, %s44
      %s53 = sshll.u32 %s51, 4
      %s54 = int_to_ptr.hbm [resolvable:$true] %s53
      %s55 = sshll.u32 [#allocation5], 4
      %s56 = int_to_ptr.vmem [resolvable:$true] %s55
      %s57 = sshll.u32 %s52, 4
      %61 = dma.hbm_to_vmem [thread:$0]  (%p49), %s54, %s57, %s56, [#allocation6], 64, 64, 4
    $region9: #{tpu_custom_call.1} parent=1 // pred_fallthru
      _
    // Predicated region
    $region10: #{tpu_custom_call.1} parent=1 // pred_check
      _
    $region11: #{tpu_custom_call.1} parent=1 // pred_check_branch
      %63 = sbr.rel (0) target = $region13
    $region12: #{tpu_custom_call.1} parent=1 // pred_region
      %s64 = sadd.s32 0, 0
      %p65 = scmp.lt.s32.totalorder %s64, 0
      %s66 = scalar_select %p65, %s64, 0
      %s67 = smul.u32 4, %s66
      %s68 = ssub.s32 1, %s67
      %s69 = smul.u32 4, %s68
      %s70 = ssub.s32 16, %s69
      %s71 = sshll.u32 %s70, 4
      %72 = vsyncadd [#allocation6], %s71
      %p73 = scmp.ne.s32.totalorder 0, %s69
      %s74 = smul.addr %s67, 4
      %s75 = scalar_lea.hbm %s2, %s74
      %s76 = smul.u32 4, %s68
      %s77 = sshll.u32 %s75, 4
      %s78 = int_to_ptr.hbm [resolvable:$true] %s77
      %s79 = sshll.u32 [#allocation7], 4
      %s80 = int_to_ptr.vmem [resolvable:$true] %s79
      %s81 = sshll.u32 %s76, 4
      %85 = dma.hbm_to_vmem [thread:$0]  (%p73), %s78, %s81, %s80, [#allocation6], 64, 64, 4
    $region13: #{tpu_custom_call.1} parent=1 // pred_fallthru
      _
    // Predicated region
    $region14: #{tpu_custom_call.1} parent=1 // pred_check
      _
    $region15: #{tpu_custom_call.1} parent=1 // pred_check_branch
      %87 = sbr.rel (0) target = $region17
    $region16: #{tpu_custom_call.1} parent=1 // pred_region
      %89 = dma.done [#allocation3], 256
    $region17: #{tpu_custom_call.1} parent=1 // pred_fallthru
      _
    // Predicated region
    $region18: #{tpu_custom_call.1} parent=1 // pred_check
      _
    $region19: #{tpu_custom_call.1} parent=1 // pred_check_branch
      %91 = sbr.rel (0) target = $region21
    $region20: #{tpu_custom_call.1} parent=1 // pred_region
      %93 = dma.done [#allocation6], 256
    $region21: #{tpu_custom_call.1} parent=1 // pred_fallthru
      _
    // Predicated region
    $region22: #{tpu_custom_call.1} parent=1 // pred_check
      _
    $region23: #{tpu_custom_call.1} parent=1 // pred_check_branch
      %95 = sbr.rel (0) target = $region25
    $region24: #{tpu_custom_call.1} parent=1 // pred_region
      %97 = dma.done [#allocation6], 256
    $region25: #{tpu_custom_call.1} parent=1 // pred_fallthru
      _
    %s98 = sadd.s32 0, 0
    %p99 = scmp.lt.s32.totalorder %s98, 0
    %s100 = scalar_select %p99, %s98, 0
    %s101 = smul.u32 4, %s100
    %s102 = ssub.s32 1, %s101
    %s103 = smul.u32 4, %s102
    %s104 = sadd.s32 0, 0
    %p105 = scmp.lt.s32.totalorder %s104, 0
    %s106 = scalar_select %p105, %s104, 0
    %s107 = smul.u32 4, %s106
    %s108 = ssub.s32 1, %s107
    %s109 = smul.u32 4, %s108
    %s110 = sadd.s32 0, 0
    %p111 = scmp.lt.s32.totalorder %s110, 0
    %s112 = scalar_select %p111, %s110, 0
    %s113 = smul.u32 4, %s112
    %s114 = ssub.s32 1, %s113
    %s115 = smul.u32 4, %s114
    %p116 = scmp.eq.s32.totalorder 0, 0
    // Predicated region
    $region26: #{tpu_custom_call.1} parent=1 // pred_check
      %p117 = pneg %p116
    $region27: #{tpu_custom_call.1} parent=1 // pred_check_branch
      %119 = sbr.rel (%p117) target = $region29
    $region28: #{tpu_custom_call.1} parent=1 // pred_region
      %120 = vst [vmem:[#allocation8] sm:$0xff] 0.0
      %121 = vst [vmem:[#allocation9] sm:$0xff] 0.0
    $region29: #{tpu_custom_call.1} parent=1 // pred_fallthru
      _
    %s122 = sadd.s32 0, 0
    %s123 = smul.u32 %s122, 16
    %v124 = vlaneseq
    %v125 = vshrl.u32 %v124, 7
    %v126 = vadd.s32 %v125, 8
    %v127 = vstv %s123
    %v128 = vadd.s32 %v127, %v125
    %v129 = vadd.s32 %v127, %v126
    %vm130 = vcmp.lt.s32.totalorder %v128, 3
    %vm131 = vcmp.lt.s32.totalorder %v129, 3
    %v132 = vld [vmem:[#allocation7] sm:$0xff]
    %v133 = vld [vmem:[#allocation7 + $0x8] sm:$0xff]
    %v134 = vld [vmem:[#allocation2] sm:$0xff]
    %v135 = vld [vmem:[#allocation2 + $0x8] sm:$0xff]
    %v136 = vsub.f32 %v134, %v132
    %v137 = vsub.f32 %v135, %v133
    %v138 = vsel %vm130, 1, 0
    %v139 = vsel %vm131, 1, 0
    %vm140 = vcmp.eq.s32.totalorder %v138, 1
    %vm141 = vcmp.eq.s32.totalorder %v139, 1
    %v142 = vsel %vm140, %v136, 0.0
    %v143 = vsel %vm141, %v137, 0.0
    %v144 = vmul.f32 %v142, %v142
    %v145 = vmul.f32 %v143, %v143
    %v146 = vld [vmem:[#allocation8] sm:$0xff]
    %v147 = vadd.f32 %v144, %v145
    %v148 = vadd.f32 %v146, %v147
    %149 = vst [vmem:[#allocation8] sm:$0xff] %v148
    %v150 = vld [vmem:[#allocation5] sm:$0xff]
    %v151 = vld [vmem:[#allocation5 + $0x8] sm:$0xff]
    %v152 = vsub.f32 %v150, %v132
    %v153 = vsub.f32 %v151, %v133
    %v154 = vsel %vm140, %v152, 0.0
    %v155 = vsel %vm141, %v153, 0.0
    %v156 = vmul.f32 %v154, %v154
    %v157 = vmul.f32 %v155, %v155
    %v158 = vld [vmem:[#allocation9] sm:$0xff]
    %v159 = vadd.f32 %v156, %v157
    %v160 = vadd.f32 %v158, %v159
    %161 = vst [vmem:[#allocation9] sm:$0xff] %v160
    // Predicated region
    $region30: #{tpu_custom_call.1} parent=1 // pred_check
      _
    $region31: #{tpu_custom_call.1} parent=1 // pred_check_branch
      %163 = sbr.rel (0) target = $region33
    $region32: #{tpu_custom_call.1} parent=1 // pred_region
      %165 = vsyncadd [#allocation4], 0
      %s167 = sshll.u32 [#allocation8], 4
      %s168 = int_to_ptr.vmem [resolvable:$true] %s167
      %s169 = sshll.u32 %s3, 4
      %s170 = int_to_ptr.hbm [resolvable:$true] %s169
      %172 = dma.vmem_to_hbm [thread:$0]  %s168, 128, %s170, [#allocation4]
    $region33: #{tpu_custom_call.1} parent=1 // pred_fallthru
      _
    // Predicated region
    $region34: #{tpu_custom_call.1} parent=1 // pred_check
      _
    $region35: #{tpu_custom_call.1} parent=1 // pred_check_branch
      %174 = sbr.rel (0) target = $region37
    $region36: #{tpu_custom_call.1} parent=1 // pred_region
      %176 = vsyncadd [#allocation10], 0
      %s178 = sshll.u32 [#allocation9], 4
      %s179 = int_to_ptr.vmem [resolvable:$true] %s178
      %s180 = sshll.u32 %s4, 4
      %s181 = int_to_ptr.hbm [resolvable:$true] %s180
      %183 = dma.vmem_to_hbm [thread:$0]  %s179, 128, %s181, [#allocation10]
    $region37: #{tpu_custom_call.1} parent=1 // pred_fallthru
      _
    // Predicated region
    $region38: #{tpu_custom_call.1} parent=1 // pred_check
      _
    $region39: #{tpu_custom_call.1} parent=1 // pred_check_branch
      %185 = sbr.rel (0) target = $region41
    $region40: #{tpu_custom_call.1} parent=1 // pred_region
      %187 = dma.done [#allocation4], 128
    $region41: #{tpu_custom_call.1} parent=1 // pred_fallthru
      _
    // Predicated region
    $region42: #{tpu_custom_call.1} parent=1 // pred_check
      _
    $region43: #{tpu_custom_call.1} parent=1 // pred_check_branch
      %189 = sbr.rel (0) target = $region45
    $region44: #{tpu_custom_call.1} parent=1 // pred_region
      %191 = dma.done [#allocation10], 128
    $region45: #{tpu_custom_call.1} parent=1 // pred_fallthru
      _
    %192 = vsyncpa [#allocation3], 1
    %193 = vsyncpa [#allocation6], 1
    %194 = vsyncpa [#allocation4], 1
    %195 = vsyncpa [#allocation10], 1

</llo_original>
